<compile_context>
chip_gen: v7x
topology: tpu7x:2x2x1
jax: 0.10.0
libtpu: 0.0.40
codegen_flags: <defaults>
</compile_context>

<pallas_src>
import numpy as np
import jax
import jax.numpy as jnp
from jax.experimental import pallas as pl
from jax.experimental.pallas import tpu as pltpu


def _dice_ce_partial_kernel(logits_ref, tgt_ref, out_ref, inter_acc, ce_acc):
    """Process one (C, TILE) block: classes on sublanes, pixels on lanes."""
    t_idx = pl.program_id(1)

    @pl.when(t_idx == 0)
    def _():
        inter_acc[...] = jnp.zeros_like(inter_acc)
        ce_acc[...] = jnp.zeros_like(ce_acc)

    x = logits_ref[...].astype(jnp.float32)           # (C, TILE)
    t = tgt_ref[...]                                   # (1, TILE) int32

    # numerically-stable log-sum-exp over the class (sublane) axis
    m = jnp.max(x, axis=0, keepdims=True)              # (1, TILE)
    e = jnp.exp(x - m)                                 # (C, TILE)
    s = jnp.sum(e, axis=0, keepdims=True)              # (1, TILE)
    lse = m + jnp.log(s)                               # (1, TILE)

    # logit of the target class per pixel (targets assumed in [0, C))
    rows = jax.lax.broadcasted_iota(jnp.int32, x.shape, 0)
    x_t = jnp.sum(jnp.where(rows == t, x, 0.0), axis=0, keepdims=True)

    # elementwise accumulation only; the cross-lane reduce happens once at end
    inter_acc[...] += jnp.exp(x_t - lse)               # softmax prob of target
    ce_acc[...] += lse - x_t                           # CE numerator per pixel

    @pl.when(t_idx == pl.num_programs(1) - 1)
    def _():
        inter_s = jnp.sum(inter_acc[...])
        ce_s = jnp.sum(ce_acc[...])
        out_ref[:, 0:1, :] = jnp.full((1, 1, 128), inter_s, jnp.float32)
        out_ref[:, 1:2, :] = jnp.full((1, 1, 128), ce_s, jnp.float32)


def _pick_tile_hw(hw, max_tile=8192):
    """Largest lane tile <= max_tile that evenly covers hw (full row if small)."""
    if hw <= max_tile:
        return hw
    t = max_tile - (max_tile % 128)
    while t >= 128:
        if hw % t == 0:
            return t
        t -= 128
    # TODO(synk): pad + mask the ragged tail instead of falling back to full rows.
    return hw


def dice_ce_loss(logits_nchw, targets_nhw, *, out_channels, alpha=0.5,
                 smooth=1.0, max_tile_hw=8192):
    n, c, h, w = logits_nchw.shape
    assert c == out_channels
    hw = h * w
    p = n * hw
    tile_hw = _pick_tile_hw(hw, max_tile_hw)
    num_inner = hw // tile_hw

    # free views -- no transpose, no extra HBM pass
    logits_r = logits_nchw.reshape(n, c, hw)
    targets_r = targets_nhw.reshape(n, 1, hw).astype(jnp.int32)

    cost = pl.CostEstimate(
        flops=8 * p * c,
        transcendentals=p * (c + 2),
        bytes_accessed=(logits_r.size * logits_r.dtype.itemsize
                        + targets_r.size * 4 + n * 2 * 128 * 4))

    partials = pl.pallas_call(
        _dice_ce_partial_kernel,
        out_shape=jax.ShapeDtypeStruct((n, 2, 128), jnp.float32),
        grid_spec=pltpu.PrefetchScalarGridSpec(
            num_scalar_prefetch=0,
            grid=(n, num_inner),
            in_specs=[
                pl.BlockSpec((None, c, tile_hw), lambda i, j: (i, 0, j)),
                pl.BlockSpec((None, 1, tile_hw), lambda i, j: (i, 0, j)),
            ],
            out_specs=pl.BlockSpec((1, 2, 128), lambda i, j: (i, 0, 0)),
            scratch_shapes=[
                pltpu.VMEM((1, tile_hw), jnp.float32),   # dice intersection acc
                pltpu.VMEM((1, tile_hw), jnp.float32),   # CE numerator acc
            ],
        ),
        compiler_params=pltpu.CompilerParams(
            dimension_semantics=("parallel", "arbitrary")),
        cost_estimate=cost,
    )(logits_r, targets_r)

    inter = jnp.sum(partials[:, 0, 0])
    ce_sum = jnp.sum(partials[:, 1, 0])
    num_pixels = jnp.float32(p)

    ce = ce_sum / num_pixels                     # mean-reduced cross-entropy
    # sum(softmax probs) == P exactly (each pixel's probs sum to 1) and
    # sum(one_hot) == P for in-range targets, so the Dice denominator is 2P.
    dice = (2.0 * inter + smooth) / (2.0 * num_pixels + smooth)
    return alpha * (1.0 - dice) + (1.0 - alpha) * ce


if __name__ == "__main__":
    key = jax.random.PRNGKey(0)
    k_logits, k_targets = jax.random.split(key)

    N, C, H, W = 2, 4, 16, 16
    logits = jax.random.normal(k_logits, (N, C, H, W), dtype=jnp.float32)
    targets = jax.random.randint(k_targets, (N, H, W), 0, C, dtype=jnp.int32)

    alpha, smooth = 0.5, 1.0
    loss = dice_ce_loss(logits, targets, out_channels=C,
                        alpha=alpha, smooth=smooth)
    loss = jax.block_until_ready(loss)

    # plain-JAX reference (matches the PyTorch module semantics)
    x = logits.astype(jnp.float32)
    lse = jax.scipy.special.logsumexp(x, axis=1)
    x_t = jnp.take_along_axis(x, targets[:, None, :, :], axis=1)[:, 0]
    ce_ref = jnp.mean(lse - x_t)
    probs = jax.nn.softmax(x, axis=1)
    onehot = jax.nn.one_hot(targets, C, axis=1, dtype=jnp.float32)
    inter = jnp.sum(probs * onehot)
    dice = (2.0 * inter + smooth) / (jnp.sum(probs) + jnp.sum(onehot) + smooth)
    ref = alpha * (1.0 - dice) + (1.0 - alpha) * ce_ref

    np.testing.assert_allclose(np.asarray(loss), np.asarray(ref),
                               rtol=1e-5, atol=1e-5)
    print("KERNEL_OK")
</pallas_src>

<mosaic_0001>
module attributes {stable_mosaic.version = 11 : i64} {
  func.func @_dice_ce_partial_kernel(%arg0: i32, %arg1: i32, %arg2: memref<1x4x256xf32, #tpu.memory_space<vmem>>, %arg3: memref<1x1x256xi32, #tpu.memory_space<vmem>>, %arg4: memref<1x2x128xf32, #tpu.memory_space<vmem>>, %arg5: memref<1x256xf32, #tpu.memory_space<vmem>>, %arg6: memref<1x256xf32, #tpu.memory_space<vmem>>) attributes {dimension_semantics = [#tpu.dimension_semantics<parallel>, #tpu.dimension_semantics<arbitrary>], iteration_bounds = array<i64: 2, 1>, scalar_prefetch = 0 : i64, scratch_operands = 2 : i64, tpu.core_type = #tpu.core_type<tc>, window_params = [{transform_indices = @transform_0, window_bounds = array<i64: 1, 4, 256>}, {transform_indices = @transform_1, window_bounds = array<i64: 1, 1, 256>}, {transform_indices = @transform_2, window_bounds = array<i64: 1, 2, 128>}]} {
    %c0_i32 = arith.constant 0 : i32
    %0 = arith.cmpi eq, %arg1, %c0_i32 : i32
    %1 = arith.extui %0 : i1 to i32
    %c0_i32_0 = arith.constant 0 : i32
    %2 = arith.cmpi ne, %1, %c0_i32_0 : i32
    scf.if %2 {
      %cst_19 = arith.constant 0.000000e+00 : f32
      %35 = vector.broadcast %cst_19 : f32 to vector<1x256xf32>
      %c0_20 = arith.constant 0 : index
      %c0_21 = arith.constant 0 : index
      %36 = vector.load %arg5[%c0_20, %c0_21] : memref<1x256xf32, #tpu.memory_space<vmem>>, vector<1x256xf32>
      tpu.vector_store %arg5[%c0_20, %c0_21], %35 {strides = array<i32>} : memref<1x256xf32, #tpu.memory_space<vmem>>, vector<1x256xf32>,
      %cst_22 = arith.constant 0.000000e+00 : f32
      %37 = vector.broadcast %cst_22 : f32 to vector<1x256xf32>
      %c0_23 = arith.constant 0 : index
      %c0_24 = arith.constant 0 : index
      %38 = vector.load %arg6[%c0_23, %c0_24] : memref<1x256xf32, #tpu.memory_space<vmem>>, vector<1x256xf32>
      tpu.vector_store %arg6[%c0_23, %c0_24], %37 {strides = array<i32>} : memref<1x256xf32, #tpu.memory_space<vmem>>, vector<1x256xf32>,
    } else {
    }
    %c0 = arith.constant 0 : index
    %c0_1 = arith.constant 0 : index
    %c0_2 = arith.constant 0 : index
    %3 = vector.load %arg2[%c0, %c0_1, %c0_2] : memref<1x4x256xf32, #tpu.memory_space<vmem>>, vector<1x4x256xf32>
    %4 = vector.shape_cast %3 : vector<1x4x256xf32> to vector<4x256xf32>
    %c0_3 = arith.constant 0 : index
    %c0_4 = arith.constant 0 : index
    %c0_5 = arith.constant 0 : index
    %5 = vector.load %arg3[%c0_3, %c0_4, %c0_5] : memref<1x1x256xi32, #tpu.memory_space<vmem>>, vector<1x1x256xi32>
    %6 = vector.shape_cast %5 : vector<1x1x256xi32> to vector<1x256xi32>
    %cst = arith.constant dense<0xFF800000> : vector<256xf32>
    %7 = vector.multi_reduction <maximumf>, %4, %cst [0] : vector<4x256xf32> to vector<256xf32>
    %8 = vector.shape_cast %7 : vector<256xf32> to vector<1x256xf32>
    %9 = vector.broadcast %8 : vector<1x256xf32> to vector<4x256xf32>
    %10 = arith.subf %4, %9 : vector<4x256xf32>
    %11 = math.exp %10 : vector<4x256xf32>
    %cst_6 = arith.constant dense<0.000000e+00> : vector<256xf32>
    %12 = vector.multi_reduction <add>, %11, %cst_6 [0] : vector<4x256xf32> to vector<256xf32>
    %13 = vector.shape_cast %12 : vector<256xf32> to vector<1x256xf32>
    %14 = math.log %13 : vector<1x256xf32>
    %15 = arith.addf %8, %14 : vector<1x256xf32>
    %16 = tpu.iota {dimensions = array<i32: 0>} : vector<4x256xi32>
    %17 = vector.broadcast %6 : vector<1x256xi32> to vector<4x256xi32>
    %18 = arith.cmpi eq, %16, %17 : vector<4x256xi32>
    %cst_7 = arith.constant 0.000000e+00 : f32
    %19 = vector.broadcast %cst_7 : f32 to vector<4x256xf32>
    %20 = arith.select %18, %4, %19 : vector<4x256xi1>, vector<4x256xf32>
    %cst_8 = arith.constant dense<0.000000e+00> : vector<256xf32>
    %21 = vector.multi_reduction <add>, %20, %cst_8 [0] : vector<4x256xf32> to vector<256xf32>
    %22 = vector.shape_cast %21 : vector<256xf32> to vector<1x256xf32>
    %c0_9 = arith.constant 0 : index
    %c0_10 = arith.constant 0 : index
    %23 = vector.load %arg5[%c0_9, %c0_10] : memref<1x256xf32, #tpu.memory_space<vmem>>, vector<1x256xf32>
    %24 = arith.subf %22, %15 : vector<1x256xf32>
    %25 = math.exp %24 : vector<1x256xf32>
    %26 = arith.addf %23, %25 : vector<1x256xf32>
    %c0_11 = arith.constant 0 : index
    %c0_12 = arith.constant 0 : index
    %27 = vector.load %arg5[%c0_11, %c0_12] : memref<1x256xf32, #tpu.memory_space<vmem>>, vector<1x256xf32>
    tpu.vector_store %arg5[%c0_11, %c0_12], %26 {strides = array<i32>} : memref<1x256xf32, #tpu.memory_space<vmem>>, vector<1x256xf32>,
    %c0_13 = arith.constant 0 : index
    %c0_14 = arith.constant 0 : index
    %28 = vector.load %arg6[%c0_13, %c0_14] : memref<1x256xf32, #tpu.memory_space<vmem>>, vector<1x256xf32>
    %29 = arith.subf %15, %22 : vector<1x256xf32>
    %30 = arith.addf %28, %29 : vector<1x256xf32>
    %c0_15 = arith.constant 0 : index
    %c0_16 = arith.constant 0 : index
    %31 = vector.load %arg6[%c0_15, %c0_16] : memref<1x256xf32, #tpu.memory_space<vmem>>, vector<1x256xf32>
    tpu.vector_store %arg6[%c0_15, %c0_16], %30 {strides = array<i32>} : memref<1x256xf32, #tpu.memory_space<vmem>>, vector<1x256xf32>,
    %c0_i32_17 = arith.constant 0 : i32
    %32 = arith.cmpi eq, %arg1, %c0_i32_17 : i32
    %33 = arith.extui %32 : i1 to i32
    %c0_i32_18 = arith.constant 0 : i32
    %34 = arith.cmpi ne, %33, %c0_i32_18 : i32
    scf.if %34 {
      %c0_19 = arith.constant 0 : index
      %c0_20 = arith.constant 0 : index
      %35 = vector.load %arg5[%c0_19, %c0_20] : memref<1x256xf32, #tpu.memory_space<vmem>>, vector<1x256xf32>
      %36 = vector.shape_cast %35 : vector<1x256xf32> to vector<1x1x256xf32>
      %cst_21 = arith.constant dense<0.000000e+00> : vector<1xf32>
      %37 = vector.multi_reduction <add>, %36, %cst_21 [1, 2] : vector<1x1x256xf32> to vector<1xf32>
      %38 = vector.shape_cast %37 : vector<1xf32> to vector<1x1x1xf32>
      %39 = vector.extract %38[0, 0, 0] : f32 from vector<1x1x1xf32>
      %c0_22 = arith.constant 0 : index
      %c0_23 = arith.constant 0 : index
      %40 = vector.load %arg6[%c0_22, %c0_23] : memref<1x256xf32, #tpu.memory_space<vmem>>, vector<1x256xf32>
      %41 = vector.shape_cast %40 : vector<1x256xf32> to vector<1x1x256xf32>
      %cst_24 = arith.constant dense<0.000000e+00> : vector<1xf32>
      %42 = vector.multi_reduction <add>, %41, %cst_24 [1, 2] : vector<1x1x256xf32> to vector<1xf32>
      %43 = vector.shape_cast %42 : vector<1xf32> to vector<1x1x1xf32>
      %44 = vector.extract %43[0, 0, 0] : f32 from vector<1x1x1xf32>
      %45 = vector.broadcast %39 : f32 to vector<1x1x128xf32>
      %c0_25 = arith.constant 0 : index
      %c0_26 = arith.constant 0 : index
      %c0_27 = arith.constant 0 : index
      %46 = vector.load %arg4[%c0_25, %c0_26, %c0_27] : memref<1x2x128xf32, #tpu.memory_space<vmem>>, vector<1x1x128xf32>
      tpu.vector_store %arg4[%c0_25, %c0_26, %c0_27], %45 {strides = array<i32>} : memref<1x2x128xf32, #tpu.memory_space<vmem>>, vector<1x1x128xf32>,
      %47 = vector.broadcast %44 : f32 to vector<1x1x128xf32>
      %c0_28 = arith.constant 0 : index
      %c1 = arith.constant 1 : index
      %c0_29 = arith.constant 0 : index
      %48 = vector.load %arg4[%c0_28, %c1, %c0_29] : memref<1x2x128xf32, #tpu.memory_space<vmem>>, vector<1x1x128xf32>
      tpu.vector_store %arg4[%c0_28, %c1, %c0_29], %47 {strides = array<i32>} : memref<1x2x128xf32, #tpu.memory_space<vmem>>, vector<1x1x128xf32>,
    } else {
    }
    return
  }
  func.func @transform_0(%arg0: i32, %arg1: i32) -> (i32, i32, i32) {
    %c0_i32 = arith.constant 0 : i32
    %c0_i32_0 = arith.constant 0 : i32
    return %arg0, %c0_i32, %arg1 : i32, i32, i32
  }
  func.func @transform_1(%arg0: i32, %arg1: i32) -> (i32, i32, i32) {
    %c0_i32 = arith.constant 0 : i32
    %c0_i32_0 = arith.constant 0 : i32
    return %arg0, %c0_i32, %arg1 : i32, i32, i32
  }
  func.func @transform_2(%arg0: i32, %arg1: i32) -> (i32, i32, i32) {
    %c0_i32 = arith.constant 0 : i32
    %c0_i32_0 = arith.constant 0 : i32
    %c0_i32_1 = arith.constant 0 : i32
    return %arg0, %c0_i32, %c0_i32_0 : i32, i32, i32
  }
}

</mosaic_0001>

<llo_original>
// kernel: tpu_custom_call.1
$region0: #{tpu_custom_call.1}
  #allocation0 [shape = 'u32[]', space=smem, size = 0x4, offset = 0x4, fixed_abs, tag = 'smem constant byte address 0x4 - core index']
  #allocation1 [shape = 'u32[144,128]{1,0:T(1,128)}', space=vmem, size = 0x12000, scoped, tag = 'internal scratch']
  #allocation2 [shape = 'f32[1,256]{1,0:T(1,128)}', space=vmem, size = 0x400, scoped, tag = 'scratch operand']
  #allocation3 [shape = 'f32[1,256]{1,0:T(1,128)}', space=vmem, size = 0x400, scoped, tag = 'scratch operand']
  %s0 = inlined_call_operand.hbm [shape: f32[2,4,256], index: 0, kind: input, shape index: {}]
  %s1 = inlined_call_operand.hbm [shape: s32[2,1,256], index: 1, kind: input, shape index: {}]
  %s2 = inlined_call_operand.hbm [shape: f32[2,2,128], index: 2, kind: output, shape index: {}]
  %s3 = sld [smem:[#allocation0]]
  $region57: #{tpu_custom_call.1} parent=0
    _
  %s5 = ssub.s32 1, %s3
  %s6 = scalar_select 0, %s5, %s3
  $region1: #{tpu_custom_call.1} parent=0
    #allocation4 [shape = 'u8[8192]{0}', space=vmem, size = 0x2000, scoped, tag = 'input window, operand 0']
    #allocation5 [shape = 's32[2]{0}', space=sflag, size = 0x8, scoped, tag = 'scoped memory for tpu_custom_call.1']
    #allocation6 [shape = 's32[2]{0}', space=sflag, size = 0x8, scoped, tag = 'scoped memory for tpu_custom_call.1']
    #allocation7 [shape = 'u8[2048]{0}', space=vmem, size = 0x800, scoped, tag = 'input window, operand 1']
    #allocation8 [shape = 's32[2]{0}', space=sflag, size = 0x8, scoped, tag = 'scoped memory for tpu_custom_call.1']
    #allocation9 [shape = 'u8[2048]{0}', space=vmem, size = 0x800, scoped, tag = 'output window, operand 0']
    %7 = vsyncpa [#allocation5], 0
    %s8 = scalar_lea.sflag [#allocation5], 1
    %9 = vsyncpa %s8, 0
    %10 = vsyncpa [#allocation8], 0
    %s11 = scalar_lea.sflag [#allocation8], 1
    %12 = vsyncpa %s11, 0
    %13 = vsyncpa [#allocation6], 0
    %s14 = scalar_lea.sflag [#allocation6], 1
    %15 = vsyncpa %s14, 0
    loop: start=0, step=1, limit=4
    $region2: #{tpu_custom_call.1} parent=1 // loop_pre_header
      _
    $region3: #{tpu_custom_call.1} parent=1 // loop_header
      %s17 = sphi 0, %s21
      %p18 = scmp.ge.s32.totalorder %s17, 4
      %s24 = sphi 0, %s36
      %s25 = sphi 0, %s32
      %s26 = sphi 0, %s24
      %s27 = sphi 0, %s25
      %s28 = sphi 0, %s26
      %s29 = sphi 0, %s27
      %s41 = sphi 0, %s43
      %s44 = sphi 0, %s41
      %s45 = sphi 0, %s44
      %s61 = sphi 0, %s45
      %s69 = sphi 0, %s71
      %s72 = sphi 0, %s69
      %s73 = sphi 0, %s72
      %s89 = sphi 0, %s73
      %s95 = sphi 0, %s97
      %s98 = sphi 0, %s95
      %s99 = sphi 0, %s98
      %s115 = sphi 0, %s99
    $region4: #{tpu_custom_call.1} parent=1 // loop_header_branch
      %20 = sbr.rel (%p18) target = $region8
    $region5: #{tpu_custom_call.1} parent=1 // loop_body
      %s22 = ssub.s32 %s17, 1
      %s23 = ssub.s32 %s17, 2
      %s30 = sadd.s32 1, %s25
      %p31 = scmp.ge.s32.totalorder %s30, 1
      %s32 = scalar_select %p31, 0, %s30
      %s33 = sadd.s32 1, %s24
      %s34 = scalar_select %p31, %s33, %s24
      %p35 = scmp.ge.s32.totalorder %s34, 2
      %s36 = scalar_select %p35, 0, %s34
      %s37 = ssub.s32 %s24, %s36
      %s38 = ssub.s32 %s25, %s32
      %s39 = sor.u32 %s37, %s38
      %p40 = scmp.eq.s32.totalorder %s39, 0
      %s42 = sadd.s32 %s41, 1
      %s43 = scalar_select %p40, %s41, %s42
      %p46 = pneg %p40
      %p47 = scmp.eq.s32.totalorder %s17, 1
      %p48 = por %p46, %p47
      %p49 = scmp.ne.s32.totalorder %s41, %s44
      %p50 = scmp.eq.s32.totalorder %s17, 0
      %p51 = por %p49, %p50
      %p52 = scmp.ne.s32.totalorder %s41, %s44
      %p53 = scmp.eq.s32.totalorder %s22, 1
      %p54 = por %p52, %p53
      %p55 = scmp.ne.s32.totalorder %s44, %s45
      %p56 = scmp.eq.s32.totalorder %s22, 0
      %p57 = por %p55, %p56
      %p58 = scmp.ne.s32.totalorder %s44, %s45
      %p59 = scmp.eq.s32.totalorder %s23, 1
      %p60 = por %p58, %p59
      %p62 = scmp.ne.s32.totalorder %s45, %s61
      %p63 = scmp.eq.s32.totalorder %s23, 0
      %p64 = por %p62, %p63
      %s65 = ssub.s32 %s24, %s36
      %s66 = ssub.s32 %s25, %s32
      %s67 = sor.u32 %s65, %s66
      %p68 = scmp.eq.s32.totalorder %s67, 0
      %s70 = sadd.s32 %s69, 1
      %s71 = scalar_select %p68, %s69, %s70
      %p74 = pneg %p68
      %p75 = scmp.eq.s32.totalorder %s17, 1
      %p76 = por %p74, %p75
      %p77 = scmp.ne.s32.totalorder %s69, %s72
      %p78 = scmp.eq.s32.totalorder %s17, 0
      %p79 = por %p77, %p78
      %p80 = scmp.ne.s32.totalorder %s69, %s72
      %p81 = scmp.eq.s32.totalorder %s22, 1
      %p82 = por %p80, %p81
      %p83 = scmp.ne.s32.totalorder %s72, %s73
      %p84 = scmp.eq.s32.totalorder %s22, 0
      %p85 = por %p83, %p84
      %p86 = scmp.ne.s32.totalorder %s72, %s73
      %p87 = scmp.eq.s32.totalorder %s23, 1
      %p88 = por %p86, %p87
      %p90 = scmp.ne.s32.totalorder %s73, %s89
      %p91 = scmp.eq.s32.totalorder %s23, 0
      %p92 = por %p90, %p91
      %s93 = ssub.s32 %s24, %s36
      %p94 = scmp.eq.s32.totalorder %s93, 0
      %s96 = sadd.s32 %s95, 1
      %s97 = scalar_select %p94, %s95, %s96
      %p100 = pneg %p94
      %p101 = scmp.eq.s32.totalorder %s17, 1
      %p102 = por %p100, %p101
      %p103 = scmp.ne.s32.totalorder %s95, %s98
      %p104 = scmp.eq.s32.totalorder %s17, 0
      %p105 = por %p103, %p104
      %p106 = scmp.ne.s32.totalorder %s95, %s98
      %p107 = scmp.eq.s32.totalorder %s22, 1
      %p108 = por %p106, %p107
      %p109 = scmp.ne.s32.totalorder %s98, %s99
      %p110 = scmp.eq.s32.totalorder %s22, 0
      %p111 = por %p109, %p110
      %p112 = scmp.ne.s32.totalorder %s98, %s99
      %p113 = scmp.eq.s32.totalorder %s23, 1
      %p114 = por %p112, %p113
      %p116 = scmp.ne.s32.totalorder %s99, %s115
      %p117 = scmp.eq.s32.totalorder %s23, 0
      %p118 = por %p116, %p117
      %p119 = scmp.le.s32.totalorder 1, %s17
      %p120 = scmp.lt.s32.totalorder %s17, 3
      %p121 = pnand %p119, %p120
      %p122 = pneg %p121
      // Predicated region
      $region9: #{tpu_custom_call.1} parent=5 // pred_check
        _
      $region10: #{tpu_custom_call.1} parent=5 // pred_check_branch
        %124 = sbr.rel (%p121) target = $region12
      $region11: #{tpu_custom_call.1} parent=5 // pred_region
        %s125 = ssub.s32 %s17, 1
      $region12: #{tpu_custom_call.1} parent=5 // pred_fallthru
        _
      %p126 = scmp.lt.s32.totalorder %s17, 2
      // Predicated region
      $region13: #{tpu_custom_call.1} parent=5 // pred_check
        %p127 = pneg %p126
      $region14: #{tpu_custom_call.1} parent=5 // pred_check_branch
        %129 = sbr.rel (%p127) target = $region16
      $region15: #{tpu_custom_call.1} parent=5 // pred_region
        // Predicated region
        $region17: #{tpu_custom_call.1} parent=15 // pred_check
          %p130 = pneg %p51
        $region18: #{tpu_custom_call.1} parent=15 // pred_check_branch
          %132 = sbr.rel (%p130) target = $region20
        $region19: #{tpu_custom_call.1} parent=15 // pred_region
          %s133 = sand.u32 %s41, 1
          %s134 = scalar_lea.sflag [#allocation5], %s133
          %s135 = sand.u32 %s41, 1
          %s136 = smul.addr %s135, 8
          %s137 = scalar_lea.vmem [#allocation4], %s136
          %s138 = smul.u32 2, %s25
          %s140 = ssub.s32 128, 128
          %141 = vsyncadd %s134, %s140
          %s142 = smul.addr %s24, 2
          %s143 = sadd.s32 %s138, %s142
          %s144 = smul.addr %s143, 64
          %s145 = scalar_lea.hbm %s0, %s144
          %s147 = sshll.u32 %s137, 4
          %s148 = int_to_ptr.vmem [resolvable:$true] %s147
          %150 = dma.hbm_to_vmem [thread:$0]  %s145, 128, %s148, %s134
        $region20: #{tpu_custom_call.1} parent=15 // pred_fallthru
          _
        // Predicated region
        $region21: #{tpu_custom_call.1} parent=15 // pred_check
          %p151 = pneg %p79
        $region22: #{tpu_custom_call.1} parent=15 // pred_check_branch
          %153 = sbr.rel (%p151) target = $region24
        $region23: #{tpu_custom_call.1} parent=15 // pred_region
          %s154 = sand.u32 %s69, 1
          %s155 = scalar_lea.sflag [#allocation8], %s154
          %s156 = sand.u32 %s69, 1
          %s157 = smul.addr %s156, 2
          %s158 = scalar_lea.vmem [#allocation7], %s157
          %s159 = smul.u32 2, %s25
          %s161 = ssub.s32 32, 32
          %162 = vsyncadd %s155, %s161
          %s163 = smul.addr %s24, 2
          %s164 = sadd.s32 %s159, %s163
          %s165 = smul.addr %s164, 16
          %s166 = scalar_lea.hbm %s1, %s165
          %s168 = sshll.u32 %s158, 4
          %s169 = int_to_ptr.vmem [resolvable:$true] %s168
          %171 = dma.hbm_to_vmem [thread:$0]  %s166, 32, %s169, %s155
        $region24: #{tpu_custom_call.1} parent=15 // pred_fallthru
          _
      $region16: #{tpu_custom_call.1} parent=5 // pred_fallthru
        _
      %p172 = scmp.le.s32.totalorder 1, %s17
      %p173 = scmp.lt.s32.totalorder %s17, 3
      %p174 = pnand %p172, %p173
      %p175 = pneg %p174
      // Predicated region
      $region25: #{tpu_custom_call.1} parent=5 // pred_check
        _
      $region26: #{tpu_custom_call.1} parent=5 // pred_check_branch
        %177 = sbr.rel (%p174) target = $region28
      $region27: #{tpu_custom_call.1} parent=5 // pred_region
        %s178 = ssub.s32 %s17, 1
        %s179 = sand.u32 %s44, 1
        %s180 = scalar_lea.sflag [#allocation5], %s179
        %s181 = sand.u32 %s44, 1
        %s182 = smul.addr %s181, 8
        %s183 = scalar_lea.vmem [#allocation4], %s182
        // Predicated region
        $region29: #{tpu_custom_call.1} parent=27 // pred_check
          %p184 = pneg %p57
        $region30: #{tpu_custom_call.1} parent=27 // pred_check_branch
          %186 = sbr.rel (%p184) target = $region32
        $region31: #{tpu_custom_call.1} parent=27 // pred_region
          %187 = dma.done %s180, 128
        $region32: #{tpu_custom_call.1} parent=27 // pred_fallthru
          _
        %s188 = sand.u32 %s72, 1
        %s189 = scalar_lea.sflag [#allocation8], %s188
        %s190 = sand.u32 %s72, 1
        %s191 = smul.addr %s190, 2
        %s192 = scalar_lea.vmem [#allocation7], %s191
        // Predicated region
        $region33: #{tpu_custom_call.1} parent=27 // pred_check
          %p193 = pneg %p85
        $region34: #{tpu_custom_call.1} parent=27 // pred_check_branch
          %195 = sbr.rel (%p193) target = $region36
        $region35: #{tpu_custom_call.1} parent=27 // pred_region
          %196 = dma.done %s189, 32
        $region36: #{tpu_custom_call.1} parent=27 // pred_fallthru
          _
        %s197 = sand.u32 %s44, 1
        %s198 = scalar_lea.sflag [#allocation5], %s197
        %s199 = sand.u32 %s44, 1
        %s200 = smul.addr %s199, 8
        %s201 = scalar_lea.vmem [#allocation4], %s200
        %p202 = pneg %p57
        %p203 = pneg %p54
        %s204 = sand.u32 %s72, 1
        %s205 = scalar_lea.sflag [#allocation8], %s204
        %s206 = sand.u32 %s72, 1
        %s207 = smul.addr %s206, 2
        %s208 = scalar_lea.vmem [#allocation7], %s207
        %p209 = pneg %p85
        %p210 = pneg %p82
        %p211 = pneg %p111
        %p212 = pneg %p108
        %s213 = sand.u32 %s98, 1
        %s214 = scalar_lea.sflag [#allocation6], %s213
        %s215 = sand.u32 %s98, 1
        %s216 = smul.addr %s215, 2
        %s217 = scalar_lea.vmem [#allocation9], %s216
        %s218 = smul.u32 2, %s27
        %s219 = smul.u32 2, %s27
        %p220 = scmp.eq.s32.totalorder %s27, 0
        // Predicated region
        $region37: #{tpu_custom_call.1} parent=27 // pred_check
          %p221 = pneg %p220
        $region38: #{tpu_custom_call.1} parent=27 // pred_check_branch
          %223 = sbr.rel (%p221) target = $region40
        $region39: #{tpu_custom_call.1} parent=27 // pred_region
          %v224 = vlaneseq
          %vm225 = vcmp.ge.s32.totalorder %v224, 0
          %vm226 = vcmp.lt.s32.totalorder %v224, 256
          %vm227 = vmand %vm225, %vm226
          %228 = vst.msk [vmem:[#allocation2] sm:$0x3] %vm227, 0.0
          %229 = vst.msk [vmem:[#allocation3] sm:$0x3] %vm227, 0.0
        $region40: #{tpu_custom_call.1} parent=27 // pred_fallthru
          _
        %v230 = vld [vmem:[%s183] sm:$0xff]
        %v231 = vld [vmem:[%s192] sm:$0x3]
        %v233 = vcombine.high %v230, %v230
        %vm235 = vcmask 1043456
        %v236 = vsel %vm235, %v230, -inf
        %v237 = vrot.slane %v236, 4
        %v238 = vmax.f32 %v236, %v237
        %v239 = vrot.slane %v238, 2
        %v240 = vmax.f32 %v238, %v239
        %v241 = vrot.slane %v240, 1
        %v242 = vmax.f32 %v240, %v241
        %v243 = vsel %vm235, %v233, -inf
        %v244 = vrot.slane %v243, 4
        %v245 = vmax.f32 %v243, %v244
        %v246 = vrot.slane %v245, 2
        %v247 = vmax.f32 %v245, %v246
        %v248 = vrot.slane %v247, 1
        %v249 = vmax.f32 %v247, %v248
        %v252 = vcombine.low %v242, %v249
        %v254 = vsub.f32 %v230, %v252
        %v255 = vmul.f32 %v254, 1.442695
        %v256 = vpow.pop %v255
        %v258 = vcombine.high %v256, %v256
        %v260 = vsel %vm235, %v256, 0.0
        %v261 = vrot.slane %v260, 4
        %v262 = vadd.f32 %v260, %v261
        %v263 = vrot.slane %v262, 2
        %v264 = vadd.f32 %v262, %v263
        %v265 = vrot.slane %v264, 1
        %v266 = vadd.f32 %v264, %v265
        %v267 = vsel %vm235, %v258, 0.0
        %v268 = vrot.slane %v267, 4
        %v269 = vadd.f32 %v267, %v268
        %v270 = vrot.slane %v269, 2
        %v271 = vadd.f32 %v269, %v270
        %v272 = vrot.slane %v271, 1
        %v273 = vadd.f32 %v271, %v272
        %v274 = vlog2.pop %v266
        %v275 = vmul.f32 %v274, 0.6931472
        %v276 = vlog2.pop %v273
        %v277 = vmul.f32 %v276, 0.6931472
        %v278 = vadd.f32 %v242, %v275
        %v279 = vadd.f32 %v249, %v277
        %v280 = vlaneseq
        %v281 = vshrl.u32 %v280, 7
        %v282 = vlaneseq
        %v283 = vshrl.u32 %v282, 7
        %v284 = vsub.s32 0, %v283
        %v285 = vrot.slane %v231, %v284
        %v286 = vlaneseq
        %v287 = vshrl.u32 %v286, 7
        %v288 = vsub.s32 1, %v287
        %v289 = vrot.slane %v231, %v288
        %vm290 = vcmp.eq.s32.totalorder %v281, %v285
        %vm291 = vcmp.eq.s32.totalorder %v281, %v289
        %v292 = vsel %vm290, %v230, 0.0
        %v293 = vsel %vm291, %v233, 0.0
        %v294 = vsel %vm235, %v292, 0.0
        %v295 = vrot.slane %v294, 4
        %v296 = vadd.f32 %v294, %v295
        %v297 = vrot.slane %v296, 2
        %v298 = vadd.f32 %v296, %v297
        %v299 = vrot.slane %v298, 1
        %v300 = vadd.f32 %v298, %v299
        %v301 = vsel %vm235, %v293, 0.0
        %v302 = vrot.slane %v301, 4
        %v303 = vadd.f32 %v301, %v302
        %v304 = vrot.slane %v303, 2
        %v305 = vadd.f32 %v303, %v304
        %v306 = vrot.slane %v305, 1
        %v307 = vadd.f32 %v305, %v306
        %v308 = vld [vmem:[#allocation2] sm:$0x3]
        %v309 = vsub.f32 %v300, %v278
        %v310 = vsub.f32 %v307, %v279
        %v311 = vmul.f32 %v309, 1.442695
        %v312 = vpow.pop %v311
        %v313 = vmul.f32 %v310, 1.442695
        %v314 = vpow.pop %v313
        %v317 = vcombine.low %v312, %v314
        %v319 = vunpack.c.l.s4 1966171168
        %v320 = vunpack.c.0.s8 %v319
        %v321 = vlaneseq
        %v322 = vshrl.u32 %v321, 7
        %v323 = vsub.s32 %v320, %v322
        %v324 = vrot.slane %v317, %v323
        %v326 = vunpack.c.l.s4 1966171168
        %v327 = vunpack.c.0.s8 %v326
        %v328 = vlaneseq
        %v329 = vshrl.u32 %v328, 7
        %v330 = vsub.s32 %v327, %v329
        %v331 = vrot.slane %v324, %v330
        %v333 = vadd.f32 %v308, %v331
        %v334 = vlaneseq
        %vm335 = vcmp.ge.s32.totalorder %v334, 0
        %vm336 = vcmp.lt.s32.totalorder %v334, 256
        %vm337 = vmand %vm335, %vm336
        %338 = vst.msk [vmem:[#allocation2] sm:$0x3] %vm337, %v333
        %v339 = vld [vmem:[#allocation3] sm:$0x3]
        %v340 = vsub.f32 %v278, %v300
        %v341 = vsub.f32 %v279, %v307
        %v344 = vcombine.low %v340, %v341
        %v346 = vunpack.c.l.s4 1966171168
        %v347 = vunpack.c.0.s8 %v346
        %v348 = vlaneseq
        %v349 = vshrl.u32 %v348, 7
        %v350 = vsub.s32 %v347, %v349
        %v351 = vrot.slane %v344, %v350
        %v353 = vunpack.c.l.s4 1966171168
        %v354 = vunpack.c.0.s8 %v353
        %v355 = vlaneseq
        %v356 = vshrl.u32 %v355, 7
        %v357 = vsub.s32 %v354, %v356
        %v358 = vrot.slane %v351, %v357
        %v360 = vadd.f32 %v339, %v358
        %361 = vst.msk [vmem:[#allocation3] sm:$0x3] %vm337, %v360
        // Predicated region
        $region41: #{tpu_custom_call.1} parent=27 // pred_check
          %p362 = pneg %p220
        $region42: #{tpu_custom_call.1} parent=27 // pred_check_branch
          %364 = sbr.rel (%p362) target = $region44
        $region43: #{tpu_custom_call.1} parent=27 // pred_region
          %v365 = vld [vmem:[#allocation2] sm:$0x3]
          %v367 = vlaneseq
          %v368 = vshrl.u32 %v367, 7
          %v369 = vsub.s32 0, %v368
          %v370 = vrot.slane %v365, %v369
          %v371 = vlaneseq
          %v372 = vshrl.u32 %v371, 7
          %v373 = vsub.s32 1, %v372
          %v374 = vrot.slane %v365, %v373
          %vm377 = vcmask 1040384
          %v378 = vsel %vm377, %v370, 0.0
          %v379 = vsel %vm377, %v374, 0.0
          %v380 = vadd.f32 %v378, %v379
          %381 = vadd.xlane.f32.xlu0 %v380
          %v382 = vpop.xlane.xlu0 %381
          %v383 = vrot.slane %v382, 4
          %v384 = vadd.f32 %v382, %v383
          %v385 = vrot.slane %v384, 2
          %v386 = vadd.f32 %v384, %v385
          %v387 = vrot.slane %v386, 1
          %v388 = vadd.f32 %v386, %v387
          %s389 = vtos %v388
          %v390 = vld [vmem:[#allocation3] sm:$0x3]
          %v392 = vlaneseq
          %v393 = vshrl.u32 %v392, 7
          %v394 = vsub.s32 0, %v393
          %v395 = vrot.slane %v390, %v394
          %v396 = vlaneseq
          %v397 = vshrl.u32 %v396, 7
          %v398 = vsub.s32 1, %v397
          %v399 = vrot.slane %v390, %v398
          %v402 = vsel %vm377, %v395, 0.0
          %v403 = vsel %vm377, %v399, 0.0
          %v404 = vadd.f32 %v402, %v403
          %405 = vadd.xlane.f32.xlu0 %v404
          %v406 = vpop.xlane.xlu0 %405
          %v407 = vrot.slane %v406, 4
          %v408 = vadd.f32 %v406, %v407
          %v409 = vrot.slane %v408, 2
          %v410 = vadd.f32 %v408, %v409
          %v411 = vrot.slane %v410, 1
          %v412 = vadd.f32 %v410, %v411
          %s413 = vtos %v412
          %v414 = vstv %s389
          %415 = vst [vmem:[%s217] sm:$0x1] %v414
          %v416 = vstv %s413
          %417 = vst [vmem:[%s217 + $0x1] sm:$0x1] %v416
        $region44: #{tpu_custom_call.1} parent=27 // pred_fallthru
          _
        %s418 = sand.u32 %s98, 1
        %s419 = scalar_lea.sflag [#allocation6], %s418
        %s420 = sand.u32 %s98, 1
        %s421 = smul.addr %s420, 2
        %s422 = scalar_lea.vmem [#allocation9], %s421
        // Predicated region
        $region45: #{tpu_custom_call.1} parent=27 // pred_check
          %p423 = pneg %p108
        $region46: #{tpu_custom_call.1} parent=27 // pred_check_branch
          %425 = sbr.rel (%p423) target = $region48
        $region47: #{tpu_custom_call.1} parent=27 // pred_region
          %s427 = ssub.s32 32, 32
          %428 = vsyncadd %s419, %s427
          %s429 = smul.addr %s26, 32
          %s430 = scalar_lea.hbm %s2, %s429
          %s432 = sshll.u32 %s422, 4
          %s433 = int_to_ptr.vmem [resolvable:$true] %s432
          %435 = dma.vmem_to_hbm [thread:$0]  %s433, 32, %s430, %s419
        $region48: #{tpu_custom_call.1} parent=27 // pred_fallthru
          _
      $region28: #{tpu_custom_call.1} parent=5 // pred_fallthru
        _
      %p436 = scmp.le.s32.totalorder 2, %s17
      // Predicated region
      $region49: #{tpu_custom_call.1} parent=5 // pred_check
        %p437 = pneg %p436
      $region50: #{tpu_custom_call.1} parent=5 // pred_check_branch
        %439 = sbr.rel (%p437) target = $region52
      $region51: #{tpu_custom_call.1} parent=5 // pred_region
        %s440 = ssub.s32 %s17, 2
        // Predicated region
        $region53: #{tpu_custom_call.1} parent=51 // pred_check
          %p441 = pneg %p114
        $region54: #{tpu_custom_call.1} parent=51 // pred_check_branch
          %443 = sbr.rel (%p441) target = $region56
        $region55: #{tpu_custom_call.1} parent=51 // pred_region
          %s444 = sand.u32 %s99, 1
          %s445 = scalar_lea.sflag [#allocation6], %s444
          %s446 = sand.u32 %s99, 1
          %s447 = smul.addr %s446, 2
          %s448 = scalar_lea.vmem [#allocation9], %s447
          %449 = dma.done %s445, 32
        $region56: #{tpu_custom_call.1} parent=51 // pred_fallthru
          _
      $region52: #{tpu_custom_call.1} parent=5 // pred_fallthru
        _
    $region6: #{tpu_custom_call.1} parent=1 // loop_footer
      %s21 = sadd.s32 1, %s17
    $region7: #{tpu_custom_call.1} parent=1 // loop_footer_branch
      %16 = sbr.rel target = $region3
    $region8: #{tpu_custom_call.1} parent=1 // loop_exit
      _
    %450 = vsyncpa [#allocation5], 1
    %s451 = scalar_lea.sflag [#allocation5], 1
    %452 = vsyncpa %s451, 1
    %453 = vsyncpa [#allocation8], 1
    %s454 = scalar_lea.sflag [#allocation8], 1
    %455 = vsyncpa %s454, 1
    %456 = vsyncpa [#allocation6], 1
    %s457 = scalar_lea.sflag [#allocation6], 1
    %458 = vsyncpa %s457, 1

</llo_original>
